<compile_context>
chip_gen: v5e
topology: v5e:2x2
jax: 0.10.0
libtpu: 0.0.40
codegen_flags: <defaults>
</compile_context>

<pallas_src>
import functools

import jax
import jax.numpy as jnp
from jax.experimental import pallas as pl
from jax.experimental.pallas import tpu as pltpu


# ----------------------------------------------------------------------------
# Kernels
# ----------------------------------------------------------------------------
def _appnp_single_kernel(adj_ref, h_ref, h0_ref, o_ref, *, alpha):
    """Whole problem in one grid step: out = (1-a) * adj @ h + a * h0[:N]."""
    acc = jnp.dot(adj_ref[...], h_ref[...], preferred_element_type=jnp.float32)
    o_ref[...] = ((1.0 - alpha) * acc
                  + alpha * h0_ref[...].astype(jnp.float32)).astype(o_ref.dtype)


def _appnp_tiled_kernel(adj_ref, h_ref, h0_ref, o_ref, acc_ref, *,
                        alpha, tk, adj_is_panel, h_is_resident):
    """One (i, j, k) grid step of out = (1-a) * adj @ h + a * h0[:N].

    adj_is_panel : adj block is the full row panel (tm, K); slice k-th chunk.
    h_is_resident: h block is the whole (K, F) matrix; slice k-th row chunk.
    """
    k = pl.program_id(2)

    @pl.when(k == 0)
    def _():
        acc_ref[...] = jnp.zeros_like(acc_ref)

    kstart = pl.multiple_of(k * tk, tk)
    adj_tile = adj_ref[:, pl.ds(kstart, tk)] if adj_is_panel else adj_ref[...]
    h_tile = h_ref[pl.ds(kstart, tk), :] if h_is_resident else h_ref[...]

    acc_ref[...] += jnp.dot(adj_tile, h_tile,
                            preferred_element_type=jnp.float32)

    @pl.when(k == pl.num_programs(2) - 1)
    def _():
        o_ref[...] = ((1.0 - alpha) * acc_ref[...]
                      + alpha * h0_ref[...].astype(jnp.float32)
                      ).astype(o_ref.dtype)


# ----------------------------------------------------------------------------
# Wrapper
# ----------------------------------------------------------------------------
def _device_kind():
    try:
        return jax.devices()[0].device_kind.lower()
    except Exception:  # pragma: no cover
        return ""


def _pick_tile(dim, cap, align):
    """Largest t <= cap with dim % t == 0 and t % align == 0, else full dim."""
    cap = min(cap, dim)
    t = (cap // align) * align
    while t >= align:
        if dim % t == 0:
            return t
        t -= align
    return dim  # full dim is always layout-legal


def appnp_conv(adj, h, h0, *, alpha=0.2, tm=None, tn=None, tk=None,
               use_bf16=True, force_tiled=False):
    """output = (1 - alpha) * adj @ h + alpha * h0[:N]   (N = adj.shape[0])."""
    N, K = adj.shape
    Kh, F = h.shape
    if Kh != K:
        raise ValueError(f"adj {adj.shape} and h {h.shape} are incompatible")
    if h0.shape[0] < N or h0.shape[1] != F:
        raise ValueError(f"h0 {h0.shape} incompatible with N={N}, F={F}")
    out_dtype = h.dtype
    alpha = float(alpha)

    # bf16 operands on the MXU with f32 accumulation: halves the HBM traffic
    # of the dominant N x K adjacency stream (kernel is mem-bound at typical F).
    compute_dtype = jnp.bfloat16 if use_bf16 else adj.dtype
    adj_c = adj.astype(compute_dtype)
    h_c = h.astype(compute_dtype)
    # h0 cast too (halves its HBM read + VMEM buffers); the residual add is
    # still done in f32 inside the kernel.
    h0_c = h0.astype(compute_dtype) if use_bf16 else h0

    cbytes = jnp.dtype(compute_dtype).itemsize
    h0bytes = jnp.dtype(h0_c.dtype).itemsize
    obytes = jnp.dtype(out_dtype).itemsize
    align_m = 16 if cbytes < 4 else 8   # bf16 packs 16 rows per sublane group

    # Lane-dense output stores: pad F < 128 up to 128 lanes (sliced off after).
    F_pad = F
    if F < 128:
        F_pad = 128
        h_c = jnp.pad(h_c, ((0, 0), (0, F_pad - F)))
        h0_c = jnp.pad(h0_c, ((0, 0), (0, F_pad - F)))
    if tn is not None:
        tn = min(tn, F_pad)

    # Chip-aware budgets. v5e MXU is 4x128^2 (128-wide output tiles); v6e/v7x
    # MXUs are 2x256^2. v7x only has 64 MiB VMEM and 2 TensorCores.
    kind = _device_kind()
    if "v5" in kind:
        cap_m, cap_n = 128, 128
        budget, vmem_limit = 80 * 2**20, 96 * 2**20
        fast_cap = 32 * 2**20
    elif "v6" in kind:
        cap_m, cap_n = 256, 256
        budget, vmem_limit = 80 * 2**20, 96 * 2**20
        fast_cap = 32 * 2**20
    else:  # v7x or unknown -> assume tightest VMEM (64 MiB physical), 2 TCs
        cap_m, cap_n = 256, 256
        budget, vmem_limit = 36 * 2**20, 48 * 2**20
        fast_cap = 6 * 2**20
    cap_k = 4096  # the footprint check below, not this cap, decides final tk

    # ------------------------------------------------------------------
    # Small-problem fast path: one grid step, no reduction axis, no scratch.
    # (Cutoff is much lower on v7x, where the tiled path gets both cores and
    #  DMA/compute overlap that grid=(1,) cannot provide.)
    # ------------------------------------------------------------------
    small_bytes = 2 * (N * K * cbytes + K * F_pad * cbytes
                       + N * F_pad * h0bytes + N * F_pad * obytes)
    if (not force_tiled and small_bytes <= fast_cap
            and (N % 8 == 0 or h0_c.shape[0] == N)):
        kernel = functools.partial(_appnp_single_kernel, alpha=alpha)
        out = pl.pallas_call(
            kernel,
            out_shape=jax.ShapeDtypeStruct((N, F_pad), out_dtype),
            grid_spec=pltpu.PrefetchScalarGridSpec(
                num_scalar_prefetch=0,
                grid=(1,),
                in_specs=[
                    pl.BlockSpec((N, K), lambda i: (0, 0)),       # adj
                    pl.BlockSpec((K, F_pad), lambda i: (0, 0)),   # h
                    pl.BlockSpec((N, F_pad), lambda i: (0, 0)),   # h0 rows [0, N)
                ],
                out_specs=pl.BlockSpec((N, F_pad), lambda i: (0, 0)),
            ),
            compiler_params=pltpu.CompilerParams(
                dimension_semantics=("arbitrary",),
                vmem_limit_bytes=vmem_limit,
            ),
        )(adj_c, h_c, h0_c)
        return out[:, :F] if F_pad != F else out

    # ------------------------------------------------------------------
    # Tiled path: grid (i, j, k); i (rows) outermost so megacore splits it,
    # k (reduction) innermost with a pl.when-init/finalize f32 accumulator.
    # ------------------------------------------------------------------
    user_tm, user_tk = tm is not None, tk is not None

    if tm is None:
        tm = _pick_tile(N, cap_m, align_m)
    tm = min(tm, N)
    if N % tm != 0:
        raise ValueError(f"tm={tm} must divide N={N} (no padding path)")

    # v7x has 2 TensorCores: keep >= 2 row blocks on the megacore-split axis.
    if "v7" in kind and not user_tm and N // tm < 2 and tm >= 2 * align_m:
        tm2 = _pick_tile(N, tm // 2, align_m)
        if tm2 < tm and N % tm2 == 0:
            tm = tm2

    if tk is None:
        tk = _pick_tile(K, cap_k, 128)
    tk = min(tk, K)
    if K % tk != 0:
        raise ValueError(f"tk={tk} must divide K={K} (no padding path)")

    # -- Mode R: keep the whole h (K, F_pad) resident in VMEM, single-buffered
    #    (it never changes across the grid). Every operand is then read from
    #    HBM exactly once. Footprint counts the panel once; the Buffered(1)
    #    fallback (double-buffered) still has headroom up to vmem_limit.
    def _fits_resident(tk_):
        return (K * F_pad * cbytes                 # resident h (1 buffer)
                + 2 * tm * tk_ * cbytes            # streamed adj tiles
                + 2 * tm * F_pad * h0bytes         # h0
                + 2 * tm * F_pad * obytes          # out
                + tm * F_pad * 4) <= budget        # f32 accumulator

    tk_saved = tk
    h_is_resident = (tn is None or tn == F_pad)
    if h_is_resident:
        if not user_tk:
            while (not _fits_resident(tk) and tk > 128 and tk % 2 == 0
                   and K % (tk // 2) == 0):
                tk //= 2
        h_is_resident = _fits_resident(tk)
    if h_is_resident:
        tn = F_pad
    else:
        tk = tk_saved

    # -- Mode S: h streamed as (tk, tn) tiles. Keep an adj row panel (tm, K)
    #    per i block when it fits, so adj is still read exactly once.
    adj_is_panel = False
    if not h_is_resident:
        if tn is None:
            tn = _pick_tile(F_pad, cap_n, 128)
        tn = min(tn, F_pad)
        if F_pad % tn != 0:
            raise ValueError(f"tn={tn} must divide the (padded) feature dim "
                             f"{F_pad} (no padding path)")

        def _fits_stream(tk_, panel):
            adj_buf = 2 * tm * (K if panel else tk_) * cbytes
            return (adj_buf + 2 * tk_ * tn * cbytes
                    + 2 * tm * tn * h0bytes + 2 * tm * tn * obytes
                    + tm * tn * 4) <= budget

        adj_is_panel = (F_pad // tn > 1) and _fits_stream(tk, True)
        if not user_tk:
            while (not _fits_stream(tk, adj_is_panel) and tk > 128
                   and tk % 2 == 0 and K % (tk // 2) == 0):
                tk //= 2
        if adj_is_panel and not _fits_stream(tk, adj_is_panel):
            adj_is_panel = False
        # Last-resort shrink of tn / tm so Mosaic is never handed an
        # over-budget working set (the previous version could fall through).
        while (not _fits_stream(tk, adj_is_panel) and tn > 128
               and tn % 2 == 0 and F_pad % (tn // 2) == 0):
            tn //= 2
        while (not _fits_stream(tk, adj_is_panel) and tm > align_m
               and tm % 2 == 0 and N % (tm // 2) == 0):
            tm //= 2
        if not _fits_stream(tk, adj_is_panel):
            raise ValueError(
                "APPNP Pallas kernel: tiled working set does not fit VMEM "
                f"(N={N}, K={K}, F={F_pad}, tm={tm}, tn={tn}, tk={tk})")
        # NOTE: when adj_is_panel is False and F_pad//tn > 1 the adjacency is
        # re-read F_pad//tn times; this only happens when the (tm, K) row
        # panel itself cannot fit the VMEM budget.

    # h0 block layout rule: first block dim must be a multiple of 8 or equal
    # the full number of rows; slice in the rare case neither holds.
    if tm % 8 != 0 and h0_c.shape[0] != N:
        h0_c = h0_c[:N]

    grid = (N // tm, F_pad // tn, K // tk)

    if adj_is_panel:
        adj_spec = pl.BlockSpec((tm, K), lambda i, j, k: (i, 0))
    else:
        adj_spec = pl.BlockSpec((tm, tk), lambda i, j, k: (i, k))

    def _h_spec(single_buffer):
        if h_is_resident:
            kwargs = {"pipeline_mode": pl.Buffered(1)} if single_buffer else {}
            return pl.BlockSpec((K, F_pad), lambda i, j, k: (0, 0), **kwargs)
        return pl.BlockSpec((tk, tn), lambda i, j, k: (k, j))

    kernel = functools.partial(_appnp_tiled_kernel, alpha=alpha, tk=tk,
                               adj_is_panel=adj_is_panel,
                               h_is_resident=h_is_resident)

    def _call(single_buffer):
        return pl.pallas_call(
            kernel,
            out_shape=jax.ShapeDtypeStruct((N, F_pad), out_dtype),
            grid_spec=pltpu.PrefetchScalarGridSpec(
                num_scalar_prefetch=0,
                grid=grid,
                in_specs=[
                    adj_spec,                                         # adj
                    _h_spec(single_buffer),                           # h
                    pl.BlockSpec((tm, tn), lambda i, j, k: (i, j)),   # h0 rows < N
                ],
                out_specs=pl.BlockSpec((tm, tn), lambda i, j, k: (i, j)),
                scratch_shapes=[pltpu.VMEM((tm, tn), jnp.float32)],
            ),
            compiler_params=pltpu.CompilerParams(
                dimension_semantics=("parallel", "parallel", "arbitrary"),
                vmem_limit_bytes=vmem_limit,
            ),
        )(adj_c, h_c, h0_c)

    if h_is_resident:
        try:
            out = _call(single_buffer=True)
        except Exception:
            # pipeline_mode=pl.Buffered(1) unsupported in this Pallas build:
            # fall back to default double-buffering (correct, 2x panel VMEM).
            out = _call(single_buffer=False)
    else:
        out = _call(single_buffer=False)

    return out[:, :F] if F_pad != F else out


# ----------------------------------------------------------------------------
# Reference + test
# ----------------------------------------------------------------------------
def _reference(adj, h, h0, alpha, use_bf16=True):
    if use_bf16:
        cd = jnp.bfloat16
        prod = jnp.dot(adj.astype(cd), h.astype(cd),
                       preferred_element_type=jnp.float32)
        res = h0[: adj.shape[0]].astype(cd).astype(jnp.float32)
    else:
        prod = jnp.dot(adj, h, preferred_element_type=jnp.float32)
        res = h0[: adj.shape[0]].astype(jnp.float32)
    return ((1.0 - alpha) * prod + alpha * res).astype(h.dtype)


if __name__ == "__main__":
    key = jax.random.PRNGKey(0)
    k_adj, k_h, k_h0 = jax.random.split(key, 3)

    N = 256       # number of nodes
    F_dim = 128   # feature dim (input_dim == output_dim for the residual)
    alpha = 0.2

    # Dense row-normalized adjacency (stand-in for the sparse spmm operand).
    adj_raw = (jax.random.uniform(k_adj, (N, N)) < 0.05).astype(jnp.float32)
    adj_raw = adj_raw + jnp.eye(N, dtype=jnp.float32)
    adj = adj_raw / jnp.sum(adj_raw, axis=1, keepdims=True)

    h = jax.random.normal(k_h, (N, F_dim), jnp.float32)
    h0 = jax.random.normal(k_h0, (N + 32, F_dim), jnp.float32)  # only [:N] used

    # 1) fast path: whole problem in VMEM -> one grid step, no accumulator.
    out_fast = jax.block_until_ready(appnp_conv(adj, h, h0, alpha=alpha))

    # 2) tiled path, resident-h mode (whole h in VMEM, single-buffered panel).
    out_tiled = jax.block_until_ready(
        appnp_conv(adj, h, h0, alpha=alpha, force_tiled=True,
                   tm=128, tn=128, tk=128))

    # 3) tiled path, wide-F streamed mode: adj row panel per i, h tiles.
    F_wide = 256
    h_w = jax.random.normal(k_h, (N, F_wide), jnp.float32)
    h0_w = jax.random.normal(k_h0, (N, F_wide), jnp.float32)
    out_wide = jax.block_until_ready(
        appnp_conv(adj, h_w, h0_w, alpha=alpha, force_tiled=True,
                   tm=128, tn=128, tk=128))

    # 4) narrow-F: exercises the 128-lane padding (+ post-slice) path.
    F_small = 64
    h_s = h[:, :F_small]
    h0_s = h0[:, :F_small]
    out_small = jax.block_until_ready(appnp_conv(adj, h_s, h0_s, alpha=alpha))

    # 5) full-f32 path (use_bf16=False), tiled: validated against the f32 ref.
    out_f32 = jax.block_until_ready(
        appnp_conv(adj, h, h0, alpha=alpha, use_bf16=False, force_tiled=True,
                   tm=128, tn=128, tk=128))

    ref_bf16 = _reference(adj, h, h0, alpha, use_bf16=True)
    ref_f32 = _reference(adj, h, h0, alpha, use_bf16=False)
    ref_wide = _reference(adj, h_w, h0_w, alpha, use_bf16=True)
    ref_small = _reference(adj, h_s, h0_s, alpha, use_bf16=True)

    assert out_fast.shape == (N, F_dim)
    assert out_small.shape == (N, F_small)
    assert jnp.allclose(out_fast, ref_bf16, atol=2e-3, rtol=2e-3), "fast path mismatch"
    assert jnp.allclose(out_tiled, ref_bf16, atol=2e-3, rtol=2e-3), "resident-h tiled path mismatch"
    assert jnp.allclose(out_wide, ref_wide, atol=2e-3, rtol=2e-3), "adj-panel tiled path mismatch"
    assert jnp.allclose(out_small, ref_small, atol=2e-3, rtol=2e-3), "padded narrow-F path mismatch"
    assert jnp.allclose(out_f32, ref_f32, atol=2e-3, rtol=2e-3), "f32 path mismatch"
    # bf16 adjacency/feature rounding vs. pure-f32 math: documented tolerance.
    assert jnp.allclose(out_fast, ref_f32, atol=5e-2, rtol=5e-2), "bf16 rounding too large"

    print("KERNEL_OK")
</pallas_src>

<mosaic_0001>
module attributes {stable_mosaic.version = 11 : i64} {
  func.func @_appnp_single_kernel(%arg0: i32, %arg1: memref<256x256xbf16, #tpu.memory_space<vmem>>, %arg2: memref<256x128xbf16, #tpu.memory_space<vmem>>, %arg3: memref<256x128xbf16, #tpu.memory_space<vmem>>, %arg4: memref<256x128xf32, #tpu.memory_space<vmem>>) attributes {dimension_semantics = [#tpu.dimension_semantics<arbitrary>], iteration_bounds = array<i64: 1>, scalar_prefetch = 0 : i64, scratch_operands = 0 : i64, tpu.core_type = #tpu.core_type<tc>, window_params = [{pipeline_mode = #tpu.pipeline_mode<synchronous>, transform_indices = @transform_0, window_bounds = array<i64: 256, 256>}, {pipeline_mode = #tpu.pipeline_mode<synchronous>, transform_indices = @transform_1, window_bounds = array<i64: 256, 128>}, {transform_indices = @transform_2, window_bounds = array<i64: 256, 128>}, {pipeline_mode = #tpu.pipeline_mode<synchronous>, transform_indices = @transform_3, window_bounds = array<i64: 256, 128>}]} {
    %c0 = arith.constant 0 : index
    %c0_0 = arith.constant 0 : index
    %0 = vector.load %arg1[%c0, %c0_0] : memref<256x256xbf16, #tpu.memory_space<vmem>>, vector<256x256xbf16>
    %c0_1 = arith.constant 0 : index
    %c0_2 = arith.constant 0 : index
    %1 = vector.load %arg2[%c0_1, %c0_2] : memref<256x128xbf16, #tpu.memory_space<vmem>>, vector<256x128xbf16>
    %cst = arith.constant dense<0.000000e+00> : vector<256x128xf32>
    %2 = tpu.matmul %0, %1, %cst {dimension_numbers = #tpu.dot_dimension_numbers<[1], [0], [0], [1], [0, 0, 1, 1], [], []>} : vector<256x256xbf16>, vector<256x128xbf16>, vector<256x128xf32> -> vector<256x128xf32>
    %cst_3 = arith.constant 8.000000e-01 : f32
    %3 = vector.broadcast %cst_3 : f32 to vector<256x128xf32>
    %4 = arith.mulf %3, %2 : vector<256x128xf32>
    %c0_4 = arith.constant 0 : index
    %c0_5 = arith.constant 0 : index
    %5 = vector.load %arg3[%c0_4, %c0_5] : memref<256x128xbf16, #tpu.memory_space<vmem>>, vector<256x128xbf16>
    %6 = arith.extf %5 : vector<256x128xbf16> to vector<256x128xf32>
    %cst_6 = arith.constant 2.000000e-01 : f32
    %7 = vector.broadcast %cst_6 : f32 to vector<256x128xf32>
    %8 = arith.mulf %7, %6 : vector<256x128xf32>
    %9 = arith.addf %4, %8 : vector<256x128xf32>
    %c0_7 = arith.constant 0 : index
    %c0_8 = arith.constant 0 : index
    %10 = vector.load %arg4[%c0_7, %c0_8] : memref<256x128xf32, #tpu.memory_space<vmem>>, vector<256x128xf32>
    tpu.vector_store %arg4[%c0_7, %c0_8], %9 {strides = array<i32>} : memref<256x128xf32, #tpu.memory_space<vmem>>, vector<256x128xf32>,
    return
  }
  func.func @transform_0(%arg0: i32) -> (i32, i32) {
    %c0_i32 = arith.constant 0 : i32
    %c0_i32_0 = arith.constant 0 : i32
    %c0_i32_1 = arith.constant 0 : i32
    return %c0_i32, %c0_i32_0 : i32, i32
  }
  func.func @transform_1(%arg0: i32) -> (i32, i32) {
    %c0_i32 = arith.constant 0 : i32
    %c0_i32_0 = arith.constant 0 : i32
    %c0_i32_1 = arith.constant 0 : i32
    return %c0_i32, %c0_i32_0 : i32, i32
  }
  func.func @transform_2(%arg0: i32) -> (i32, i32) {
    %c0_i32 = arith.constant 0 : i32
    %c0_i32_0 = arith.constant 0 : i32
    %c0_i32_1 = arith.constant 0 : i32
    return %c0_i32, %c0_i32_0 : i32, i32
  }
  func.func @transform_3(%arg0: i32) -> (i32, i32) {
    %c0_i32 = arith.constant 0 : i32
    %c0_i32_0 = arith.constant 0 : i32
    %c0_i32_1 = arith.constant 0 : i32
    return %c0_i32, %c0_i32_0 : i32, i32
  }
}

</mosaic_0001>

<llo_original>
// kernel: tpu_custom_call.1
$region0: #{tpu_custom_call.1}
  #allocation0 [shape = 'u32[]', space=smem, size = 0x4, offset = 0x4, fixed_abs, tag = 'smem constant byte address 0x4 - core index']
  #allocation1 [shape = 'u32[72,128]{1,0:T(1,128)}', space=vmem, size = 0x9000, scoped, tag = 'internal scratch']
  %s0 = inlined_call_operand.hbm [shape: bf16[256,256], index: 0, kind: input, shape index: {}]
  %s1 = inlined_call_operand.hbm [shape: bf16[256,128], index: 1, kind: input, shape index: {}]
  %s2 = inlined_call_operand.hbm [shape: bf16[288,128], index: 2, kind: input, shape index: {}]
  %s3 = inlined_call_operand.hbm [shape: f32[256,128], index: 3, kind: output, shape index: {}]
  %s4 = sld [smem:[#allocation0]]
  $region34: #{tpu_custom_call.1} parent=0
    _
  %s6 = ssub.s32 1, %s4
  %s7 = scalar_select 0, %s6, %s4
  $region1: #{tpu_custom_call.1} parent=0
    #allocation2 [shape = 'u8[131072]{0}', space=vmem, size = 0x20000, scoped, tag = 'input window, operand 0, single buffered']
    #allocation3 [shape = 's32[1]{0}', space=sflag, size = 0x4, scoped, tag = 'scoped memory for tpu_custom_call.1']
    #allocation4 [shape = 's32[1]{0}', space=sflag, size = 0x4, scoped, tag = 'scoped memory for tpu_custom_call.1']
    #allocation5 [shape = 'u8[65536]{0}', space=vmem, size = 0x10000, scoped, tag = 'input window, operand 1, single buffered']
    #allocation6 [shape = 's32[1]{0}', space=sflag, size = 0x4, scoped, tag = 'scoped memory for tpu_custom_call.1']
    #allocation7 [shape = 'u8[65536]{0}', space=vmem, size = 0x10000, scoped, tag = 'input window, operand 2, single buffered']
    #allocation8 [shape = 'u8[131072]{0}', space=vmem, size = 0x20000, scoped, tag = 'output window, operand 0, single buffered']
    %8 = vsyncpa [#allocation3], 0
    %9 = vsyncpa [#allocation6], 0
    %10 = vsyncpa [#allocation4], 0
    // Predicated region
    $region2: #{tpu_custom_call.1} parent=1 // pred_check
      _
    $region3: #{tpu_custom_call.1} parent=1 // pred_check_branch
      %12 = sbr.rel (0) target = $region5
    $region4: #{tpu_custom_call.1} parent=1 // pred_region
      %14 = vsyncadd [#allocation3], 0
      %s15 = sshll.u32 %s0, 4
      %s16 = int_to_ptr.hbm [resolvable:$true] %s15
      %s17 = sshll.u32 [#allocation2], 4
      %s18 = int_to_ptr.vmem [resolvable:$true] %s17
      %23 = dma.hbm_to_vmem [thread:$0]  %s16, 4096, %s18, [#allocation3], 128, 128, 8
    $region5: #{tpu_custom_call.1} parent=1 // pred_fallthru
      _
    // Predicated region
    $region6: #{tpu_custom_call.1} parent=1 // pred_check
      _
    $region7: #{tpu_custom_call.1} parent=1 // pred_check_branch
      %25 = sbr.rel (0) target = $region9
    $region8: #{tpu_custom_call.1} parent=1 // pred_region
      %27 = vsyncadd [#allocation6], 0
      %s28 = sshll.u32 %s1, 4
      %s29 = int_to_ptr.hbm [resolvable:$true] %s28
      %s30 = sshll.u32 [#allocation5], 4
      %s31 = int_to_ptr.vmem [resolvable:$true] %s30
      %36 = dma.hbm_to_vmem [thread:$0]  %s29, 2048, %s31, [#allocation6], 64, 64, 4
    $region9: #{tpu_custom_call.1} parent=1 // pred_fallthru
      _
    // Predicated region
    $region10: #{tpu_custom_call.1} parent=1 // pred_check
      _
    $region11: #{tpu_custom_call.1} parent=1 // pred_check_branch
      %38 = sbr.rel (0) target = $region13
    $region12: #{tpu_custom_call.1} parent=1 // pred_region
      %40 = vsyncadd [#allocation6], 0
      %s41 = sshll.u32 %s2, 4
      %s42 = int_to_ptr.hbm [resolvable:$true] %s41
      %s43 = sshll.u32 [#allocation7], 4
      %s44 = int_to_ptr.vmem [resolvable:$true] %s43
      %49 = dma.hbm_to_vmem [thread:$0]  %s42, 2048, %s44, [#allocation6], 64, 64, 4
    $region13: #{tpu_custom_call.1} parent=1 // pred_fallthru
      _
    // Predicated region
    $region14: #{tpu_custom_call.1} parent=1 // pred_check
      _
    $region15: #{tpu_custom_call.1} parent=1 // pred_check_branch
      %51 = sbr.rel (0) target = $region17
    $region16: #{tpu_custom_call.1} parent=1 // pred_region
      %53 = dma.done [#allocation3], 4096
    $region17: #{tpu_custom_call.1} parent=1 // pred_fallthru
      _
    // Predicated region
    $region18: #{tpu_custom_call.1} parent=1 // pred_check
      _
    $region19: #{tpu_custom_call.1} parent=1 // pred_check_branch
      %55 = sbr.rel (0) target = $region21
    $region20: #{tpu_custom_call.1} parent=1 // pred_region
      %57 = dma.done [#allocation6], 2048
    $region21: #{tpu_custom_call.1} parent=1 // pred_fallthru
      _
    // Predicated region
    $region22: #{tpu_custom_call.1} parent=1 // pred_check
      _
    $region23: #{tpu_custom_call.1} parent=1 // pred_check_branch
      %59 = sbr.rel (0) target = $region25
    $region24: #{tpu_custom_call.1} parent=1 // pred_region
      %61 = dma.done [#allocation6], 2048
    $region25: #{tpu_custom_call.1} parent=1 // pred_fallthru
      _
    %v62 = vld [vmem:[#allocation2] sm:$0xff]
    %v63 = vld [vmem:[#allocation2 + $0x8] sm:$0xff]
    %v64 = vld [vmem:[#allocation2 + $0x10] sm:$0xff]
    %v65 = vld [vmem:[#allocation2 + $0x18] sm:$0xff]
    %v66 = vld [vmem:[#allocation2 + $0x20] sm:$0xff]
    %v67 = vld [vmem:[#allocation2 + $0x28] sm:$0xff]
    %v68 = vld [vmem:[#allocation2 + $0x30] sm:$0xff]
    %v69 = vld [vmem:[#allocation2 + $0x38] sm:$0xff]
    %v70 = vld [vmem:[#allocation2 + $0x40] sm:$0xff]
    %v71 = vld [vmem:[#allocation2 + $0x48] sm:$0xff]
    %v72 = vld [vmem:[#allocation2 + $0x50] sm:$0xff]
    %v73 = vld [vmem:[#allocation2 + $0x58] sm:$0xff]
    %v74 = vld [vmem:[#allocation2 + $0x60] sm:$0xff]
    %v75 = vld [vmem:[#allocation2 + $0x68] sm:$0xff]
    %v76 = vld [vmem:[#allocation2 + $0x70] sm:$0xff]
    %v77 = vld [vmem:[#allocation2 + $0x78] sm:$0xff]
    %v78 = vld [vmem:[#allocation2 + $0x80] sm:$0xff]
    %v79 = vld [vmem:[#allocation2 + $0x88] sm:$0xff]
    %v80 = vld [vmem:[#allocation2 + $0x90] sm:$0xff]
    %v81 = vld [vmem:[#allocation2 + $0x98] sm:$0xff]
    %v82 = vld [vmem:[#allocation2 + $0xa0] sm:$0xff]
    %v83 = vld [vmem:[#allocation2 + $0xa8] sm:$0xff]
    %v84 = vld [vmem:[#allocation2 + $0xb0] sm:$0xff]
    %v85 = vld [vmem:[#allocation2 + $0xb8] sm:$0xff]
    %v86 = vld [vmem:[#allocation2 + $0xc0] sm:$0xff]
    %v87 = vld [vmem:[#allocation2 + $0xc8] sm:$0xff]
    %v88 = vld [vmem:[#allocation2 + $0xd0] sm:$0xff]
    %v89 = vld [vmem:[#allocation2 + $0xd8] sm:$0xff]
    %v90 = vld [vmem:[#allocation2 + $0xe0] sm:$0xff]
    %v91 = vld [vmem:[#allocation2 + $0xe8] sm:$0xff]
    %v92 = vld [vmem:[#allocation2 + $0xf0] sm:$0xff]
    %v93 = vld [vmem:[#allocation2 + $0xf8] sm:$0xff]
    %v94 = vld [vmem:[#allocation5] sm:$0xf]
    %v95 = vld [vmem:[#allocation5 + $0x4] sm:$0xf]
    %v96 = vld [vmem:[#allocation5 + $0x8] sm:$0xf]
    %v97 = vld [vmem:[#allocation5 + $0xc] sm:$0xf]
    %v98 = vld [vmem:[#allocation5 + $0x10] sm:$0xf]
    %v99 = vld [vmem:[#allocation5 + $0x14] sm:$0xf]
    %v100 = vld [vmem:[#allocation5 + $0x18] sm:$0xf]
    %v101 = vld [vmem:[#allocation5 + $0x1c] sm:$0xf]
    %v102 = vld [vmem:[#allocation5 + $0x20] sm:$0xf]
    %v103 = vld [vmem:[#allocation5 + $0x24] sm:$0xf]
    %v104 = vld [vmem:[#allocation5 + $0x28] sm:$0xf]
    %v105 = vld [vmem:[#allocation5 + $0x2c] sm:$0xf]
    %v106 = vld [vmem:[#allocation5 + $0x30] sm:$0xf]
    %v107 = vld [vmem:[#allocation5 + $0x34] sm:$0xf]
    %v108 = vld [vmem:[#allocation5 + $0x38] sm:$0xf]
    %v109 = vld [vmem:[#allocation5 + $0x3c] sm:$0xf]
    %v110 = vld [vmem:[#allocation5 + $0x40] sm:$0xf]
    %v111 = vld [vmem:[#allocation5 + $0x44] sm:$0xf]
    %v112 = vld [vmem:[#allocation5 + $0x48] sm:$0xf]
    %v113 = vld [vmem:[#allocation5 + $0x4c] sm:$0xf]
    %v114 = vld [vmem:[#allocation5 + $0x50] sm:$0xf]
    %v115 = vld [vmem:[#allocation5 + $0x54] sm:$0xf]
    %v116 = vld [vmem:[#allocation5 + $0x58] sm:$0xf]
    %v117 = vld [vmem:[#allocation5 + $0x5c] sm:$0xf]
    %v118 = vld [vmem:[#allocation5 + $0x60] sm:$0xf]
    %v119 = vld [vmem:[#allocation5 + $0x64] sm:$0xf]
    %v120 = vld [vmem:[#allocation5 + $0x68] sm:$0xf]
    %v121 = vld [vmem:[#allocation5 + $0x6c] sm:$0xf]
    %v122 = vld [vmem:[#allocation5 + $0x70] sm:$0xf]
    %v123 = vld [vmem:[#allocation5 + $0x74] sm:$0xf]
    %v124 = vld [vmem:[#allocation5 + $0x78] sm:$0xf]
    %v125 = vld [vmem:[#allocation5 + $0x7c] sm:$0xf]
    %v158 = vunpack.c.l.b16 %v62
    %v159 = vunpack.c.h.b16 %v62
    %v160 = vunpack.c.l.b16 %v63
    %v161 = vunpack.c.h.b16 %v63
    %v162 = vunpack.c.l.b16 %v64
    %v163 = vunpack.c.h.b16 %v64
    %v164 = vunpack.c.l.b16 %v65
    %v165 = vunpack.c.h.b16 %v65
    %v166 = vunpack.c.l.b16 %v66
    %v167 = vunpack.c.h.b16 %v66
    %v168 = vunpack.c.l.b16 %v67
    %v169 = vunpack.c.h.b16 %v67
    %v170 = vunpack.c.l.b16 %v68
    %v171 = vunpack.c.h.b16 %v68
    %v172 = vunpack.c.l.b16 %v69
    %v173 = vunpack.c.h.b16 %v69
    %v174 = vunpack.c.l.b16 %v70
    %v175 = vunpack.c.h.b16 %v70
    %v176 = vunpack.c.l.b16 %v71
    %v177 = vunpack.c.h.b16 %v71
    %v178 = vunpack.c.l.b16 %v72
    %v179 = vunpack.c.h.b16 %v72
    %v180 = vunpack.c.l.b16 %v73
    %v181 = vunpack.c.h.b16 %v73
    %v182 = vunpack.c.l.b16 %v74
    %v183 = vunpack.c.h.b16 %v74
    %v184 = vunpack.c.l.b16 %v75
    %v185 = vunpack.c.h.b16 %v75
    %v186 = vunpack.c.l.b16 %v76
    %v187 = vunpack.c.h.b16 %v76
    %v188 = vunpack.c.l.b16 %v77
    %v189 = vunpack.c.h.b16 %v77
    %v190 = vunpack.c.l.b16 %v78
    %v191 = vunpack.c.h.b16 %v78
    %v192 = vunpack.c.l.b16 %v79
    %v193 = vunpack.c.h.b16 %v79
    %v194 = vunpack.c.l.b16 %v80
    %v195 = vunpack.c.h.b16 %v80
    %v196 = vunpack.c.l.b16 %v81
    %v197 = vunpack.c.h.b16 %v81
    %v198 = vunpack.c.l.b16 %v82
    %v199 = vunpack.c.h.b16 %v82
    %v200 = vunpack.c.l.b16 %v83
    %v201 = vunpack.c.h.b16 %v83
    %v202 = vunpack.c.l.b16 %v84
    %v203 = vunpack.c.h.b16 %v84
    %v204 = vunpack.c.l.b16 %v85
    %v205 = vunpack.c.h.b16 %v85
    %v206 = vunpack.c.l.b16 %v86
    %v207 = vunpack.c.h.b16 %v86
    %v208 = vunpack.c.l.b16 %v87
    %v209 = vunpack.c.h.b16 %v87
    %v210 = vunpack.c.l.b16 %v88
    %v211 = vunpack.c.h.b16 %v88
    %v212 = vunpack.c.l.b16 %v89
    %v213 = vunpack.c.h.b16 %v89
    %v214 = vunpack.c.l.b16 %v90
    %v215 = vunpack.c.h.b16 %v90
    %v216 = vunpack.c.l.b16 %v91
    %v217 = vunpack.c.h.b16 %v91
    %v218 = vunpack.c.l.b16 %v92
    %v219 = vunpack.c.h.b16 %v92
    %v220 = vunpack.c.l.b16 %v93
    %v221 = vunpack.c.h.b16 %v93
    %v222 = vpack.c.b16 %v160, %v158
    %v223 = vpack.c.b16 %v161, %v159
    %v224 = vpack.c.b16 %v164, %v162
    %v225 = vpack.c.b16 %v165, %v163
    %v226 = vpack.c.b16 %v168, %v166
    %v227 = vpack.c.b16 %v169, %v167
    %v228 = vpack.c.b16 %v172, %v170
    %v229 = vpack.c.b16 %v173, %v171
    %v230 = vpack.c.b16 %v176, %v174
    %v231 = vpack.c.b16 %v177, %v175
    %v232 = vpack.c.b16 %v180, %v178
    %v233 = vpack.c.b16 %v181, %v179
    %v234 = vpack.c.b16 %v184, %v182
    %v235 = vpack.c.b16 %v185, %v183
    %v236 = vpack.c.b16 %v188, %v186
    %v237 = vpack.c.b16 %v189, %v187
    %v238 = vpack.c.b16 %v192, %v190
    %v239 = vpack.c.b16 %v193, %v191
    %v240 = vpack.c.b16 %v196, %v194
    %v241 = vpack.c.b16 %v197, %v195
    %v242 = vpack.c.b16 %v200, %v198
    %v243 = vpack.c.b16 %v201, %v199
    %v244 = vpack.c.b16 %v204, %v202
    %v245 = vpack.c.b16 %v205, %v203
    %v246 = vpack.c.b16 %v208, %v206
    %v247 = vpack.c.b16 %v209, %v207
    %v248 = vpack.c.b16 %v212, %v210
    %v249 = vpack.c.b16 %v213, %v211
    %v250 = vpack.c.b16 %v216, %v214
    %v251 = vpack.c.b16 %v217, %v215
    %v252 = vpack.c.b16 %v220, %v218
    %v253 = vpack.c.b16 %v221, %v219
    %v318 = vunpack.c.l.b16 %v94
    %v319 = vunpack.c.l.b16 %v95
    %v320 = vunpack.c.l.b16 %v96
    %v321 = vunpack.c.l.b16 %v97
    %v322 = vunpack.c.l.b16 %v98
    %v323 = vunpack.c.l.b16 %v99
    %v324 = vunpack.c.l.b16 %v100
    %v325 = vunpack.c.l.b16 %v101
    %v326 = vunpack.c.l.b16 %v102
    %v327 = vunpack.c.l.b16 %v103
    %v328 = vunpack.c.l.b16 %v104
    %v329 = vunpack.c.l.b16 %v105
    %v330 = vunpack.c.l.b16 %v106
    %v331 = vunpack.c.l.b16 %v107
    %v332 = vunpack.c.l.b16 %v108
    %v333 = vunpack.c.l.b16 %v109
    %v334 = vunpack.c.l.b16 %v110
    %v335 = vunpack.c.l.b16 %v111
    %v336 = vunpack.c.l.b16 %v112
    %v337 = vunpack.c.l.b16 %v113
    %v338 = vunpack.c.l.b16 %v114
    %v339 = vunpack.c.l.b16 %v115
    %v340 = vunpack.c.l.b16 %v116
    %v341 = vunpack.c.l.b16 %v117
    %v342 = vunpack.c.l.b16 %v118
    %v343 = vunpack.c.l.b16 %v119
    %v344 = vunpack.c.l.b16 %v120
    %v345 = vunpack.c.l.b16 %v121
    %v346 = vunpack.c.l.b16 %v122
    %v347 = vunpack.c.l.b16 %v123
    %v348 = vunpack.c.l.b16 %v124
    %v349 = vunpack.c.l.b16 %v125
    %v350 = vpack.c.b16 %v319, %v318
    %v351 = vpack.c.b16 %v321, %v320
    %v352 = vpack.c.b16 %v323, %v322
    %v353 = vpack.c.b16 %v325, %v324
    %v354 = vpack.c.b16 %v327, %v326
    %v355 = vpack.c.b16 %v329, %v328
    %v356 = vpack.c.b16 %v331, %v330
    %v357 = vpack.c.b16 %v333, %v332
    %v358 = vpack.c.b16 %v335, %v334
    %v359 = vpack.c.b16 %v337, %v336
    %v360 = vpack.c.b16 %v339, %v338
    %v361 = vpack.c.b16 %v341, %v340
    %v362 = vpack.c.b16 %v343, %v342
    %v363 = vpack.c.b16 %v345, %v344
    %v364 = vpack.c.b16 %v347, %v346
    %v365 = vpack.c.b16 %v349, %v348
    %382 = vmatpush.bf16.msra.mxu0 %v357
    %383 = vmatpush.bf16.msra.mxu0 %v356
    %384 = vmatpush.bf16.msra.mxu0 %v355
    %385 = vmatpush.bf16.msra.mxu0 %v354
    %386 = vmatpush.bf16.msra.mxu0 %v353
    %387 = vmatpush.bf16.msra.mxu0 %v352
    %388 = vmatpush.bf16.msra.mxu0 %v351
    %389 = vmatpush.bf16.msra.mxu0 %v350
    %390 = vmatmul.bf16.gmra.mxu0 %v222
    %v391 = vpop.f32.mrf.mxu0
    %v392 = vadd.f32 0.0, %v391
    %v393 = vpop.f32.mrf.mxu0
    %v394 = vadd.f32 0.0, %v393
    %395 = vmatmul.bf16.gmra.mxu0 %v224
    %v396 = vpop.f32.mrf.mxu0
    %v397 = vadd.f32 0.0, %v396
    %v398 = vpop.f32.mrf.mxu0
    %v399 = vadd.f32 0.0, %v398
    %400 = vmatmul.bf16.gmra.mxu0 %v226
    %v401 = vpop.f32.mrf.mxu0
    %v402 = vadd.f32 0.0, %v401
    %v403 = vpop.f32.mrf.mxu0
    %v404 = vadd.f32 0.0, %v403
    %405 = vmatmul.bf16.gmra.mxu0 %v228
    %v406 = vpop.f32.mrf.mxu0
    %v407 = vadd.f32 0.0, %v406
    %v408 = vpop.f32.mrf.mxu0
    %v409 = vadd.f32 0.0, %v408
    %410 = vmatmul.bf16.gmra.mxu0 %v230
    %v411 = vpop.f32.mrf.mxu0
    %v412 = vadd.f32 0.0, %v411
    %v413 = vpop.f32.mrf.mxu0
    %v414 = vadd.f32 0.0, %v413
    %415 = vmatmul.bf16.gmra.mxu0 %v232
    %v416 = vpop.f32.mrf.mxu0
    %v417 = vadd.f32 0.0, %v416
    %v418 = vpop.f32.mrf.mxu0
    %v419 = vadd.f32 0.0, %v418
    %420 = vmatmul.bf16.gmra.mxu0 %v234
    %v421 = vpop.f32.mrf.mxu0
    %v422 = vadd.f32 0.0, %v421
    %v423 = vpop.f32.mrf.mxu0
    %v424 = vadd.f32 0.0, %v423
    %425 = vmatmul.bf16.gmra.mxu0 %v236
    %v426 = vpop.f32.mrf.mxu0
    %v427 = vadd.f32 0.0, %v426
    %v428 = vpop.f32.mrf.mxu0
    %v429 = vadd.f32 0.0, %v428
    %430 = vmatmul.bf16.gmra.mxu0 %v238
    %v431 = vpop.f32.mrf.mxu0
    %v432 = vadd.f32 0.0, %v431
    %v433 = vpop.f32.mrf.mxu0
    %v434 = vadd.f32 0.0, %v433
    %435 = vmatmul.bf16.gmra.mxu0 %v240
    %v436 = vpop.f32.mrf.mxu0
    %v437 = vadd.f32 0.0, %v436
    %v438 = vpop.f32.mrf.mxu0
    %v439 = vadd.f32 0.0, %v438
    %440 = vmatmul.bf16.gmra.mxu0 %v242
    %v441 = vpop.f32.mrf.mxu0
    %v442 = vadd.f32 0.0, %v441
    %v443 = vpop.f32.mrf.mxu0
    %v444 = vadd.f32 0.0, %v443
    %445 = vmatmul.bf16.gmra.mxu0 %v244
    %v446 = vpop.f32.mrf.mxu0
    %v447 = vadd.f32 0.0, %v446
    %v448 = vpop.f32.mrf.mxu0
    %v449 = vadd.f32 0.0, %v448
    %450 = vmatmul.bf16.gmra.mxu0 %v246
    %v451 = vpop.f32.mrf.mxu0
    %v452 = vadd.f32 0.0, %v451
    %v453 = vpop.f32.mrf.mxu0
    %v454 = vadd.f32 0.0, %v453
    %455 = vmatmul.bf16.gmra.mxu0 %v248
    %v456 = vpop.f32.mrf.mxu0
    %v457 = vadd.f32 0.0, %v456
    %v458 = vpop.f32.mrf.mxu0
    %v459 = vadd.f32 0.0, %v458
    %460 = vmatmul.bf16.gmra.mxu0 %v250
    %v461 = vpop.f32.mrf.mxu0
    %v462 = vadd.f32 0.0, %v461
    %v463 = vpop.f32.mrf.mxu0
    %v464 = vadd.f32 0.0, %v463
    %465 = vmatmul.bf16.gmra.mxu0 %v252
    %v466 = vpop.f32.mrf.mxu0
    %v467 = vadd.f32 0.0, %v466
    %v468 = vpop.f32.mrf.mxu0
    %v469 = vadd.f32 0.0, %v468
    %470 = vdwg.mxu0
    %471 = vmatpush.bf16.msra.mxu0 %v365
    %472 = vmatpush.bf16.msra.mxu0 %v364
    %473 = vmatpush.bf16.msra.mxu0 %v363
    %474 = vmatpush.bf16.msra.mxu0 %v362
    %475 = vmatpush.bf16.msra.mxu0 %v361
    %476 = vmatpush.bf16.msra.mxu0 %v360
    %477 = vmatpush.bf16.msra.mxu0 %v359
    %478 = vmatpush.bf16.msra.mxu0 %v358
    %479 = vmatmul.bf16.gmra.mxu0 %v223
    %v480 = vpop.f32.mrf.mxu0
    %v481 = vadd.f32 %v392, %v480
    %v482 = vpop.f32.mrf.mxu0
    %v483 = vadd.f32 %v394, %v482
    %484 = vmatmul.bf16.gmra.mxu0 %v225
    %v485 = vpop.f32.mrf.mxu0
    %v486 = vadd.f32 %v397, %v485
    %v487 = vpop.f32.mrf.mxu0
    %v488 = vadd.f32 %v399, %v487
    %489 = vmatmul.bf16.gmra.mxu0 %v227
    %v490 = vpop.f32.mrf.mxu0
    %v491 = vadd.f32 %v402, %v490
    %v492 = vpop.f32.mrf.mxu0
    %v493 = vadd.f32 %v404, %v492
    %494 = vmatmul.bf16.gmra.mxu0 %v229
    %v495 = vpop.f32.mrf.mxu0
    %v496 = vadd.f32 %v407, %v495
    %v497 = vpop.f32.mrf.mxu0
    %v498 = vadd.f32 %v409, %v497
    %499 = vmatmul.bf16.gmra.mxu0 %v231
    %v500 = vpop.f32.mrf.mxu0
    %v501 = vadd.f32 %v412, %v500
    %v502 = vpop.f32.mrf.mxu0
    %v503 = vadd.f32 %v414, %v502
    %504 = vmatmul.bf16.gmra.mxu0 %v233
    %v505 = vpop.f32.mrf.mxu0
    %v506 = vadd.f32 %v417, %v505
    %v507 = vpop.f32.mrf.mxu0
    %v508 = vadd.f32 %v419, %v507
    %509 = vmatmul.bf16.gmra.mxu0 %v235
    %v510 = vpop.f32.mrf.mxu0
    %v511 = vadd.f32 %v422, %v510
    %v512 = vpop.f32.mrf.mxu0
    %v513 = vadd.f32 %v424, %v512
    %514 = vmatmul.bf16.gmra.mxu0 %v237
    %v515 = vpop.f32.mrf.mxu0
    %v516 = vadd.f32 %v427, %v515
    %v517 = vpop.f32.mrf.mxu0
    %v518 = vadd.f32 %v429, %v517
    %519 = vmatmul.bf16.gmra.mxu0 %v239
    %v520 = vpop.f32.mrf.mxu0
    %v521 = vadd.f32 %v432, %v520
    %v522 = vpop.f32.mrf.mxu0
    %v523 = vadd.f32 %v434, %v522
    %524 = vmatmul.bf16.gmra.mxu0 %v241
    %v525 = vpop.f32.mrf.mxu0
    %v526 = vadd.f32 %v437, %v525
    %v527 = vpop.f32.mrf.mxu0
    %v528 = vadd.f32 %v439, %v527
    %529 = vmatmul.bf16.gmra.mxu0 %v243
    %v530 = vpop.f32.mrf.mxu0
    %v531 = vadd.f32 %v442, %v530
    %v532 = vpop.f32.mrf.mxu0
    %v533 = vadd.f32 %v444, %v532
    %534 = vmatmul.bf16.gmra.mxu0 %v245
    %v535 = vpop.f32.mrf.mxu0
    %v536 = vadd.f32 %v447, %v535
    %v537 = vpop.f32.mrf.mxu0
    %v538 = vadd.f32 %v449, %v537
    %539 = vmatmul.bf16.gmra.mxu0 %v247
    %v540 = vpop.f32.mrf.mxu0
    %v541 = vadd.f32 %v452, %v540
    %v542 = vpop.f32.mrf.mxu0
    %v543 = vadd.f32 %v454, %v542
    %544 = vmatmul.bf16.gmra.mxu0 %v249
    %v545 = vpop.f32.mrf.mxu0
    %v546 = vadd.f32 %v457, %v545
    %v547 = vpop.f32.mrf.mxu0
    %v548 = vadd.f32 %v459, %v547
    %549 = vmatmul.bf16.gmra.mxu0 %v251
    %v550 = vpop.f32.mrf.mxu0
    %v551 = vadd.f32 %v462, %v550
    %v552 = vpop.f32.mrf.mxu0
    %v553 = vadd.f32 %v464, %v552
    %554 = vmatmul.bf16.gmra.mxu0 %v253
    %v555 = vpop.f32.mrf.mxu0
    %v556 = vadd.f32 %v467, %v555
    %v557 = vpop.f32.mrf.mxu0
    %v558 = vadd.f32 %v469, %v557
    %559 = vdwg.mxu0
    %v560 = vmul.f32 %v481, 0.8
    %v561 = vmul.f32 %v483, 0.8
    %v562 = vmul.f32 %v486, 0.8
    %v563 = vmul.f32 %v488, 0.8
    %v564 = vmul.f32 %v491, 0.8
    %v565 = vmul.f32 %v493, 0.8
    %v566 = vmul.f32 %v496, 0.8
    %v567 = vmul.f32 %v498, 0.8
    %v568 = vmul.f32 %v501, 0.8
    %v569 = vmul.f32 %v503, 0.8
    %v570 = vmul.f32 %v506, 0.8
    %v571 = vmul.f32 %v508, 0.8
    %v572 = vmul.f32 %v511, 0.8
    %v573 = vmul.f32 %v513, 0.8
    %v574 = vmul.f32 %v516, 0.8
    %v575 = vmul.f32 %v518, 0.8
    %v576 = vmul.f32 %v521, 0.8
    %v577 = vmul.f32 %v523, 0.8
    %v578 = vmul.f32 %v526, 0.8
    %v579 = vmul.f32 %v528, 0.8
    %v580 = vmul.f32 %v531, 0.8
    %v581 = vmul.f32 %v533, 0.8
    %v582 = vmul.f32 %v536, 0.8
    %v583 = vmul.f32 %v538, 0.8
    %v584 = vmul.f32 %v541, 0.8
    %v585 = vmul.f32 %v543, 0.8
    %v586 = vmul.f32 %v546, 0.8
    %v587 = vmul.f32 %v548, 0.8
    %v588 = vmul.f32 %v551, 0.8
    %v589 = vmul.f32 %v553, 0.8
    %v590 = vmul.f32 %v556, 0.8
    %v591 = vmul.f32 %v558, 0.8
    %v592 = vld [vmem:[#allocation7] sm:$0xf]
    %v593 = vld [vmem:[#allocation7 + $0x4] sm:$0xf]
    %v594 = vld [vmem:[#allocation7 + $0x8] sm:$0xf]
    %v595 = vld [vmem:[#allocation7 + $0xc] sm:$0xf]
    %v596 = vld [vmem:[#allocation7 + $0x10] sm:$0xf]
    %v597 = vld [vmem:[#allocation7 + $0x14] sm:$0xf]
    %v598 = vld [vmem:[#allocation7 + $0x18] sm:$0xf]
    %v599 = vld [vmem:[#allocation7 + $0x1c] sm:$0xf]
    %v600 = vld [vmem:[#allocation7 + $0x20] sm:$0xf]
    %v601 = vld [vmem:[#allocation7 + $0x24] sm:$0xf]
    %v602 = vld [vmem:[#allocation7 + $0x28] sm:$0xf]
    %v603 = vld [vmem:[#allocation7 + $0x2c] sm:$0xf]
    %v604 = vld [vmem:[#allocation7 + $0x30] sm:$0xf]
    %v605 = vld [vmem:[#allocation7 + $0x34] sm:$0xf]
    %v606 = vld [vmem:[#allocation7 + $0x38] sm:$0xf]
    %v607 = vld [vmem:[#allocation7 + $0x3c] sm:$0xf]
    %v608 = vld [vmem:[#allocation7 + $0x40] sm:$0xf]
    %v609 = vld [vmem:[#allocation7 + $0x44] sm:$0xf]
    %v610 = vld [vmem:[#allocation7 + $0x48] sm:$0xf]
    %v611 = vld [vmem:[#allocation7 + $0x4c] sm:$0xf]
    %v612 = vld [vmem:[#allocation7 + $0x50] sm:$0xf]
    %v613 = vld [vmem:[#allocation7 + $0x54] sm:$0xf]
    %v614 = vld [vmem:[#allocation7 + $0x58] sm:$0xf]
    %v615 = vld [vmem:[#allocation7 + $0x5c] sm:$0xf]
    %v616 = vld [vmem:[#allocation7 + $0x60] sm:$0xf]
    %v617 = vld [vmem:[#allocation7 + $0x64] sm:$0xf]
    %v618 = vld [vmem:[#allocation7 + $0x68] sm:$0xf]
    %v619 = vld [vmem:[#allocation7 + $0x6c] sm:$0xf]
    %v620 = vld [vmem:[#allocation7 + $0x70] sm:$0xf]
    %v621 = vld [vmem:[#allocation7 + $0x74] sm:$0xf]
    %v622 = vld [vmem:[#allocation7 + $0x78] sm:$0xf]
    %v623 = vld [vmem:[#allocation7 + $0x7c] sm:$0xf]
    %v624 = vunpack.c.l.bf16 %v592
    %v625 = vunpack.c.l.bf16 %v593
    %v626 = vunpack.c.l.bf16 %v594
    %v627 = vunpack.c.l.bf16 %v595
    %v628 = vunpack.c.l.bf16 %v596
    %v629 = vunpack.c.l.bf16 %v597
    %v630 = vunpack.c.l.bf16 %v598
    %v631 = vunpack.c.l.bf16 %v599
    %v632 = vunpack.c.l.bf16 %v600
    %v633 = vunpack.c.l.bf16 %v601
    %v634 = vunpack.c.l.bf16 %v602
    %v635 = vunpack.c.l.bf16 %v603
    %v636 = vunpack.c.l.bf16 %v604
    %v637 = vunpack.c.l.bf16 %v605
    %v638 = vunpack.c.l.bf16 %v606
    %v639 = vunpack.c.l.bf16 %v607
    %v640 = vunpack.c.l.bf16 %v608
    %v641 = vunpack.c.l.bf16 %v609
    %v642 = vunpack.c.l.bf16 %v610
    %v643 = vunpack.c.l.bf16 %v611
    %v644 = vunpack.c.l.bf16 %v612
    %v645 = vunpack.c.l.bf16 %v613
    %v646 = vunpack.c.l.bf16 %v614
    %v647 = vunpack.c.l.bf16 %v615
    %v648 = vunpack.c.l.bf16 %v616
    %v649 = vunpack.c.l.bf16 %v617
    %v650 = vunpack.c.l.bf16 %v618
    %v651 = vunpack.c.l.bf16 %v619
    %v652 = vunpack.c.l.bf16 %v620
    %v653 = vunpack.c.l.bf16 %v621
    %v654 = vunpack.c.l.bf16 %v622
    %v655 = vunpack.c.l.bf16 %v623
    %v656 = vmul.f32 %v624, 0.2
    %v657 = vmul.f32 %v625, 0.2
    %v658 = vmul.f32 %v626, 0.2
    %v659 = vmul.f32 %v627, 0.2
    %v660 = vmul.f32 %v628, 0.2
    %v661 = vmul.f32 %v629, 0.2
    %v662 = vmul.f32 %v630, 0.2
    %v663 = vmul.f32 %v631, 0.2
    %v664 = vmul.f32 %v632, 0.2
    %v665 = vmul.f32 %v633, 0.2
    %v666 = vmul.f32 %v634, 0.2
    %v667 = vmul.f32 %v635, 0.2
    %v668 = vmul.f32 %v636, 0.2
    %v669 = vmul.f32 %v637, 0.2
    %v670 = vmul.f32 %v638, 0.2
    %v671 = vmul.f32 %v639, 0.2
    %v672 = vmul.f32 %v640, 0.2
    %v673 = vmul.f32 %v641, 0.2
    %v674 = vmul.f32 %v642, 0.2
    %v675 = vmul.f32 %v643, 0.2
    %v676 = vmul.f32 %v644, 0.2
    %v677 = vmul.f32 %v645, 0.2
    %v678 = vmul.f32 %v646, 0.2
    %v679 = vmul.f32 %v647, 0.2
    %v680 = vmul.f32 %v648, 0.2
    %v681 = vmul.f32 %v649, 0.2
    %v682 = vmul.f32 %v650, 0.2
    %v683 = vmul.f32 %v651, 0.2
    %v684 = vmul.f32 %v652, 0.2
    %v685 = vmul.f32 %v653, 0.2
    %v686 = vmul.f32 %v654, 0.2
    %v687 = vmul.f32 %v655, 0.2
    %v688 = vadd.f32 %v560, %v656
    %v689 = vadd.f32 %v561, %v657
    %v690 = vadd.f32 %v562, %v658
    %v691 = vadd.f32 %v563, %v659
    %v692 = vadd.f32 %v564, %v660
    %v693 = vadd.f32 %v565, %v661
    %v694 = vadd.f32 %v566, %v662
    %v695 = vadd.f32 %v567, %v663
    %v696 = vadd.f32 %v568, %v664
    %v697 = vadd.f32 %v569, %v665
    %v698 = vadd.f32 %v570, %v666
    %v699 = vadd.f32 %v571, %v667
    %v700 = vadd.f32 %v572, %v668
    %v701 = vadd.f32 %v573, %v669
    %v702 = vadd.f32 %v574, %v670
    %v703 = vadd.f32 %v575, %v671
    %v704 = vadd.f32 %v576, %v672
    %v705 = vadd.f32 %v577, %v673
    %v706 = vadd.f32 %v578, %v674
    %v707 = vadd.f32 %v579, %v675
    %v708 = vadd.f32 %v580, %v676
    %v709 = vadd.f32 %v581, %v677
    %v710 = vadd.f32 %v582, %v678
    %v711 = vadd.f32 %v583, %v679
    %v712 = vadd.f32 %v584, %v680
    %v713 = vadd.f32 %v585, %v681
    %v714 = vadd.f32 %v586, %v682
    %v715 = vadd.f32 %v587, %v683
    %v716 = vadd.f32 %v588, %v684
    %v717 = vadd.f32 %v589, %v685
    %v718 = vadd.f32 %v590, %v686
    %v719 = vadd.f32 %v591, %v687
    %720 = vst [vmem:[#allocation8] sm:$0xff] %v688
    %721 = vst [vmem:[#allocation8 + $0x8] sm:$0xff] %v689
    %722 = vst [vmem:[#allocation8 + $0x10] sm:$0xff] %v690
    %723 = vst [vmem:[#allocation8 + $0x18] sm:$0xff] %v691
    %724 = vst [vmem:[#allocation8 + $0x20] sm:$0xff] %v692
    %725 = vst [vmem:[#allocation8 + $0x28] sm:$0xff] %v693
    %726 = vst [vmem:[#allocation8 + $0x30] sm:$0xff] %v694
    %727 = vst [vmem:[#allocation8 + $0x38] sm:$0xff] %v695
    %728 = vst [vmem:[#allocation8 + $0x40] sm:$0xff] %v696
    %729 = vst [vmem:[#allocation8 + $0x48] sm:$0xff] %v697
    %730 = vst [vmem:[#allocation8 + $0x50] sm:$0xff] %v698
    %731 = vst [vmem:[#allocation8 + $0x58] sm:$0xff] %v699
    %732 = vst [vmem:[#allocation8 + $0x60] sm:$0xff] %v700
    %733 = vst [vmem:[#allocation8 + $0x68] sm:$0xff] %v701
    %734 = vst [vmem:[#allocation8 + $0x70] sm:$0xff] %v702
    %735 = vst [vmem:[#allocation8 + $0x78] sm:$0xff] %v703
    %736 = vst [vmem:[#allocation8 + $0x80] sm:$0xff] %v704
    %737 = vst [vmem:[#allocation8 + $0x88] sm:$0xff] %v705
    %738 = vst [vmem:[#allocation8 + $0x90] sm:$0xff] %v706
    %739 = vst [vmem:[#allocation8 + $0x98] sm:$0xff] %v707
    %740 = vst [vmem:[#allocation8 + $0xa0] sm:$0xff] %v708
    %741 = vst [vmem:[#allocation8 + $0xa8] sm:$0xff] %v709
    %742 = vst [vmem:[#allocation8 + $0xb0] sm:$0xff] %v710
    %743 = vst [vmem:[#allocation8 + $0xb8] sm:$0xff] %v711
    %744 = vst [vmem:[#allocation8 + $0xc0] sm:$0xff] %v712
    %745 = vst [vmem:[#allocation8 + $0xc8] sm:$0xff] %v713
    %746 = vst [vmem:[#allocation8 + $0xd0] sm:$0xff] %v714
    %747 = vst [vmem:[#allocation8 + $0xd8] sm:$0xff] %v715
    %748 = vst [vmem:[#allocation8 + $0xe0] sm:$0xff] %v716
    %749 = vst [vmem:[#allocation8 + $0xe8] sm:$0xff] %v717
    %750 = vst [vmem:[#allocation8 + $0xf0] sm:$0xff] %v718
    %751 = vst [vmem:[#allocation8 + $0xf8] sm:$0xff] %v719
    // Predicated region
    $region26: #{tpu_custom_call.1} parent=1 // pred_check
      _
    $region27: #{tpu_custom_call.1} parent=1 // pred_check_branch
      %753 = sbr.rel (0) target = $region29
    $region28: #{tpu_custom_call.1} parent=1 // pred_region
      %755 = vsyncadd [#allocation4], 0
      %s756 = sshll.u32 [#allocation8], 4
      %s757 = int_to_ptr.vmem [resolvable:$true] %s756
      %s758 = sshll.u32 %s3, 4
      %s759 = int_to_ptr.hbm [resolvable:$true] %s758
      %764 = dma.vmem_to_hbm [thread:$0]  %s757, 4096, %s759, [#allocation4], 128, 128, 8
    $region29: #{tpu_custom_call.1} parent=1 // pred_fallthru
      _
    // Predicated region
    $region30: #{tpu_custom_call.1} parent=1 // pred_check
      _
    $region31: #{tpu_custom_call.1} parent=1 // pred_check_branch
      %766 = sbr.rel (0) target = $region33
    $region32: #{tpu_custom_call.1} parent=1 // pred_region
      %768 = dma.done [#allocation4], 4096
    $region33: #{tpu_custom_call.1} parent=1 // pred_fallthru
      _
    %769 = vsyncpa [#allocation3], 1
    %770 = vsyncpa [#allocation6], 1
    %771 = vsyncpa [#allocation4], 1

</llo_original>
